<compile_context>
chip_gen: v7x
topology: tpu7x:2x2x1
jax: 0.10.0
libtpu: 0.0.40
codegen_flags: <defaults>
</compile_context>

<pallas_src>
import functools

import jax
import jax.numpy as jnp
from jax.experimental import pallas as pl
from jax.experimental.pallas import tpu as pltpu


def _round_up(x, m):
    return ((x + m - 1) // m) * m


def _fused_mlp_kernel(*refs, activators):
    """Whole MLP on one batch tile: x -> [Linear (+bias) (+act)] * N -> out.

    refs = (x_ref, w0_ref, b0_ref, w1_ref, b1_ref, ..., o_ref).
    Matmuls run on the MXU with f32 accumulation; bias/activation epilogue in f32.
    Intermediates live in vregs/VMEM only (never written to HBM).
    """
    x_ref, o_ref = refs[0], refs[-1]
    wb = refs[1:-1]
    y = x_ref[...]
    for j, act in enumerate(activators):
        w_ref, b_ref = wb[2 * j], wb[2 * j + 1]
        # Cast to the weight dtype right before the dot (no-op in the f32 path).
        y = jnp.dot(y.astype(w_ref.dtype), w_ref[...],
                    preferred_element_type=jnp.float32)
        y = y + b_ref[...]  # (TB, N) + (1, N) broadcast, f32
        if act == "relu":
            y = jnp.maximum(y, 0.0)
        elif act == "tanh":
            y = jnp.tanh(y)
        elif act == "sigmoid":
            y = jax.nn.sigmoid(y)
        elif act is None:
            pass
        else:
            raise ValueError(f"unsupported activator: {act}")
    o_ref[...] = y.astype(o_ref.dtype)


def numeric_only_gene_forward(x, params, activators, *,
                              block_batch=2048, compute_dtype=jnp.float32):
    """Mirrors NumericOnlyGene.forward (2-D numeric input, eval mode) in one kernel.

    x:      (B, input_size) f32
    params: list of (w, b) with w: (in, out) f32, b: (1, out) f32
    activators: list of {"relu", "tanh", "sigmoid", None}, one per Linear layer.
    Dropout ("technical") layers are identity at inference.
    """
    B, K = x.shape
    assert len(params) == len(activators)
    n_out = params[-1][0].shape[1]

    # --- batch tiling: TB multiple of 8; no wrapper-side pad/cast of x ----------
    tb = min(block_batch, _round_up(B, 8))
    if B > 8:
        # v7x has 2 TensorCores: make sure the "parallel" batch axis has >= 2 steps.
        tb = min(tb, _round_up(pl.cdiv(B, 2), 8))
    grid = pl.cdiv(B, tb)  # edge block (if any) is masked by Pallas

    # Weights go in at compute_dtype (no-op for f32); bias stays f32 for the epilogue.
    wb_args = []
    in_specs = [pl.BlockSpec((tb, K), lambda i: (i, 0))]
    flat_args = [x]
    for (w, b) in params:
        kin, nout = w.shape
        # constant index_map -> DMA'd once, stays VMEM-resident across grid steps
        in_specs.append(pl.BlockSpec((kin, nout), lambda i: (0, 0)))
        in_specs.append(pl.BlockSpec((1, nout), lambda i: (0, 0)))
        flat_args += [w.astype(compute_dtype), b.astype(jnp.float32)]
    del wb_args

    kernel = functools.partial(_fused_mlp_kernel, activators=tuple(activators))
    out = pl.pallas_call(
        kernel,
        out_shape=jax.ShapeDtypeStruct((B, n_out), jnp.float32),
        grid_spec=pl.GridSpec(
            grid=(grid,),
            in_specs=in_specs,
            # last block dim == full array dim (n_out) -> legal without 128-padding
            out_specs=pl.BlockSpec((tb, n_out), lambda i: (i, 0)),
        ),
        compiler_params=pltpu.CompilerParams(
            dimension_semantics=("parallel",),  # batch-parallel (megacore on v7x)
        ),
    )(*flat_args)
    return out


def reference_forward_f32(x, params, activators):
    """Pure-f32 reference matching the PyTorch module exactly."""
    y = x
    for (w, b), act in zip(params, activators):
        y = y @ w + b
        if act == "relu":
            y = jnp.maximum(y, 0.0)
    return y


def init_params(key, input_size, layer_dims):
    """Deterministic PyTorch-style (Kaiming-uniform-ish) init for each Linear."""
    params = []
    in_dim = input_size
    for out_dim in layer_dims:
        key, kw, kb = jax.random.split(key, 3)
        bound = 1.0 / jnp.sqrt(in_dim)
        w = jax.random.uniform(kw, (in_dim, out_dim), jnp.float32, -bound, bound)
        b = jax.random.uniform(kb, (1, out_dim), jnp.float32, -bound, bound)
        params.append((w, b))
        in_dim = out_dim
    return params


if __name__ == "__main__":
    key = jax.random.PRNGKey(0)

    input_size = 32
    layer_dims = [64, 32, 1]
    activators = ["relu", "relu", None]

    key, kp = jax.random.split(key)
    params = init_params(kp, input_size, layer_dims)

    # Small batch (single grid step).
    key, kx = jax.random.split(key)
    x_small = jax.random.normal(kx, (8, input_size), jnp.float32)
    y_small = jax.block_until_ready(
        numeric_only_gene_forward(x_small, params, activators))
    assert y_small.shape == (8, layer_dims[-1]), y_small.shape
    ref_small = reference_forward_f32(x_small, params, activators)
    assert jnp.allclose(y_small, ref_small, atol=1e-4, rtol=1e-4), \
        jnp.max(jnp.abs(y_small - ref_small))

    # Larger batch exercising multiple grid steps + masked partial edge block.
    key, kx2 = jax.random.split(key)
    x_big = jax.random.normal(kx2, (300, input_size), jnp.float32)
    y_big = jax.block_until_ready(
        numeric_only_gene_forward(x_big, params, activators))
    assert y_big.shape == (300, layer_dims[-1]), y_big.shape
    ref_big = reference_forward_f32(x_big, params, activators)
    assert jnp.allclose(y_big, ref_big, atol=1e-4, rtol=1e-4), \
        jnp.max(jnp.abs(y_big - ref_big))

    print("KERNEL_OK")
</pallas_src>

<mosaic_0001>
module attributes {stable_mosaic.version = 11 : i64} {
  func.func @_fused_mlp_kernel(%arg0: i32, %arg1: memref<8x32xf32, #tpu.memory_space<vmem>>, %arg2: memref<32x64xf32, #tpu.memory_space<vmem>>, %arg3: memref<1x64xf32, #tpu.memory_space<vmem>>, %arg4: memref<64x32xf32, #tpu.memory_space<vmem>>, %arg5: memref<1x32xf32, #tpu.memory_space<vmem>>, %arg6: memref<32x1xf32, #tpu.memory_space<vmem>>, %arg7: memref<1x1xf32, #tpu.memory_space<vmem>>, %arg8: memref<8x1xf32, #tpu.memory_space<vmem>>) attributes {dimension_semantics = [#tpu.dimension_semantics<parallel>], iteration_bounds = array<i64: 1>, scalar_prefetch = 0 : i64, scratch_operands = 0 : i64, tpu.core_type = #tpu.core_type<tc>, window_params = [{transform_indices = @transform_0, window_bounds = array<i64: 8, 32>}, {pipeline_mode = #tpu.pipeline_mode<synchronous>, transform_indices = @transform_1, window_bounds = array<i64: 32, 64>}, {pipeline_mode = #tpu.pipeline_mode<synchronous>, transform_indices = @transform_2, window_bounds = array<i64: 1, 64>}, {pipeline_mode = #tpu.pipeline_mode<synchronous>, transform_indices = @transform_3, window_bounds = array<i64: 64, 32>}, {pipeline_mode = #tpu.pipeline_mode<synchronous>, transform_indices = @transform_4, window_bounds = array<i64: 1, 32>}, {pipeline_mode = #tpu.pipeline_mode<synchronous>, transform_indices = @transform_5, window_bounds = array<i64: 32, 1>}, {pipeline_mode = #tpu.pipeline_mode<synchronous>, transform_indices = @transform_6, window_bounds = array<i64: 1, 1>}, {transform_indices = @transform_7, window_bounds = array<i64: 8, 1>}]} {
    %c0 = arith.constant 0 : index
    %c0_0 = arith.constant 0 : index
    %0 = vector.load %arg1[%c0, %c0_0] : memref<8x32xf32, #tpu.memory_space<vmem>>, vector<8x32xf32>
    %c0_1 = arith.constant 0 : index
    %c0_2 = arith.constant 0 : index
    %1 = vector.load %arg2[%c0_1, %c0_2] : memref<32x64xf32, #tpu.memory_space<vmem>>, vector<32x64xf32>
    %cst = arith.constant dense<0.000000e+00> : vector<8x64xf32>
    %2 = tpu.matmul %0, %1, %cst {dimension_numbers = #tpu.dot_dimension_numbers<[1], [0], [0], [1], [0, 0, 1, 1], [], []>} : vector<8x32xf32>, vector<32x64xf32>, vector<8x64xf32> -> vector<8x64xf32>
    %c0_3 = arith.constant 0 : index
    %c0_4 = arith.constant 0 : index
    %3 = vector.load %arg3[%c0_3, %c0_4] : memref<1x64xf32, #tpu.memory_space<vmem>>, vector<1x64xf32>
    %4 = vector.broadcast %3 : vector<1x64xf32> to vector<8x64xf32>
    %5 = arith.addf %2, %4 : vector<8x64xf32>
    %cst_5 = arith.constant 0.000000e+00 : f32
    %6 = vector.broadcast %cst_5 : f32 to vector<8x64xf32>
    %7 = arith.maximumf %5, %6 : vector<8x64xf32>
    %c0_6 = arith.constant 0 : index
    %c0_7 = arith.constant 0 : index
    %8 = vector.load %arg4[%c0_6, %c0_7] : memref<64x32xf32, #tpu.memory_space<vmem>>, vector<64x32xf32>
    %cst_8 = arith.constant dense<0.000000e+00> : vector<8x32xf32>
    %9 = tpu.matmul %7, %8, %cst_8 {dimension_numbers = #tpu.dot_dimension_numbers<[1], [0], [0], [1], [0, 0, 1, 1], [], []>} : vector<8x64xf32>, vector<64x32xf32>, vector<8x32xf32> -> vector<8x32xf32>
    %c0_9 = arith.constant 0 : index
    %c0_10 = arith.constant 0 : index
    %10 = vector.load %arg5[%c0_9, %c0_10] : memref<1x32xf32, #tpu.memory_space<vmem>>, vector<1x32xf32>
    %11 = vector.broadcast %10 : vector<1x32xf32> to vector<8x32xf32>
    %12 = arith.addf %9, %11 : vector<8x32xf32>
    %cst_11 = arith.constant 0.000000e+00 : f32
    %13 = vector.broadcast %cst_11 : f32 to vector<8x32xf32>
    %14 = arith.maximumf %12, %13 : vector<8x32xf32>
    %c0_12 = arith.constant 0 : index
    %c0_13 = arith.constant 0 : index
    %15 = vector.load %arg6[%c0_12, %c0_13] : memref<32x1xf32, #tpu.memory_space<vmem>>, vector<32x1xf32>
    %cst_14 = arith.constant dense<0.000000e+00> : vector<8x1xf32>
    %16 = tpu.matmul %14, %15, %cst_14 {dimension_numbers = #tpu.dot_dimension_numbers<[1], [0], [0], [1], [0, 0, 1, 1], [], []>} : vector<8x32xf32>, vector<32x1xf32>, vector<8x1xf32> -> vector<8x1xf32>
    %c0_15 = arith.constant 0 : index
    %c0_16 = arith.constant 0 : index
    %17 = vector.load %arg7[%c0_15, %c0_16] : memref<1x1xf32, #tpu.memory_space<vmem>>, vector<1x1xf32>
    %18 = vector.broadcast %17 : vector<1x1xf32> to vector<8x1xf32>
    %19 = arith.addf %16, %18 : vector<8x1xf32>
    %c0_17 = arith.constant 0 : index
    %c0_18 = arith.constant 0 : index
    %20 = vector.load %arg8[%c0_17, %c0_18] : memref<8x1xf32, #tpu.memory_space<vmem>>, vector<8x1xf32>
    tpu.vector_store %arg8[%c0_17, %c0_18], %19 {strides = array<i32>} : memref<8x1xf32, #tpu.memory_space<vmem>>, vector<8x1xf32>,
    return
  }
  func.func @transform_0(%arg0: i32) -> (i32, i32) {
    %c0_i32 = arith.constant 0 : i32
    %c0_i32_0 = arith.constant 0 : i32
    return %arg0, %c0_i32 : i32, i32
  }
  func.func @transform_1(%arg0: i32) -> (i32, i32) {
    %c0_i32 = arith.constant 0 : i32
    %c0_i32_0 = arith.constant 0 : i32
    %c0_i32_1 = arith.constant 0 : i32
    return %c0_i32, %c0_i32_0 : i32, i32
  }
  func.func @transform_2(%arg0: i32) -> (i32, i32) {
    %c0_i32 = arith.constant 0 : i32
    %c0_i32_0 = arith.constant 0 : i32
    %c0_i32_1 = arith.constant 0 : i32
    return %c0_i32, %c0_i32_0 : i32, i32
  }
  func.func @transform_3(%arg0: i32) -> (i32, i32) {
    %c0_i32 = arith.constant 0 : i32
    %c0_i32_0 = arith.constant 0 : i32
    %c0_i32_1 = arith.constant 0 : i32
    return %c0_i32, %c0_i32_0 : i32, i32
  }
  func.func @transform_4(%arg0: i32) -> (i32, i32) {
    %c0_i32 = arith.constant 0 : i32
    %c0_i32_0 = arith.constant 0 : i32
    %c0_i32_1 = arith.constant 0 : i32
    return %c0_i32, %c0_i32_0 : i32, i32
  }
  func.func @transform_5(%arg0: i32) -> (i32, i32) {
    %c0_i32 = arith.constant 0 : i32
    %c0_i32_0 = arith.constant 0 : i32
    %c0_i32_1 = arith.constant 0 : i32
    return %c0_i32, %c0_i32_0 : i32, i32
  }
  func.func @transform_6(%arg0: i32) -> (i32, i32) {
    %c0_i32 = arith.constant 0 : i32
    %c0_i32_0 = arith.constant 0 : i32
    %c0_i32_1 = arith.constant 0 : i32
    return %c0_i32, %c0_i32_0 : i32, i32
  }
  func.func @transform_7(%arg0: i32) -> (i32, i32) {
    %c0_i32 = arith.constant 0 : i32
    %c0_i32_0 = arith.constant 0 : i32
    return %arg0, %c0_i32 : i32, i32
  }
}

</mosaic_0001>

<llo_original>
// kernel: tpu_custom_call.1
$region0: #{tpu_custom_call.1}
  #allocation0 [shape = 'u32[]', space=smem, size = 0x4, offset = 0x4, fixed_abs, tag = 'smem constant byte address 0x4 - core index']
  #allocation1 [shape = 'u32[144,128]{1,0:T(1,128)}', space=vmem, size = 0x12000, scoped, tag = 'internal scratch']
  #allocation2 [shape = 'f32[1,1]{1,0:T(1,128)S(1)}', space=vmem, size = 0x200, scoped, tag = 'scoped memory for tpu_custom_call.1']
  %s0 = inlined_call_operand.vmem [shape: f32[8,32], index: 0, kind: input, shape index: {}]
  %s1 = inlined_call_operand.vmem [shape: f32[32,64], index: 1, kind: input, shape index: {}]
  %s2 = inlined_call_operand.vmem [shape: f32[1,64], index: 2, kind: input, shape index: {}]
  %s3 = inlined_call_operand.vmem [shape: f32[64,32], index: 3, kind: input, shape index: {}]
  %s4 = inlined_call_operand.vmem [shape: f32[1,32], index: 4, kind: input, shape index: {}]
  %s5 = inlined_call_operand.vmem [shape: f32[32,1], index: 5, kind: input, shape index: {}]
  %s6 = inlined_call_operand.<no memory space> [shape: f32[1,1], index: 6, kind: input, shape index: {}]
  %s7 = inlined_call_operand.vmem [shape: f32[8,1], index: 7, kind: output, shape index: {}]
  %s8 = sld [smem:[#allocation0]]
  $region38: #{tpu_custom_call.1} parent=0
    _
  %s10 = ssub.s32 1, %s8
  %s11 = scalar_select 0, %s10, %s8
  %v12 = vstv %s6
  %13 = vst [vmem:[#allocation2] sm:$0x1] %v12
  // Predicated region
  $region2: #{tpu_custom_call.1} parent=0 // pred_check
    _
  $region3: #{tpu_custom_call.1} parent=0 // pred_check_branch
    %15 = sbr.rel (0) target = $region5
  $region4: #{tpu_custom_call.1} parent=0 // pred_region
    _
  $region5: #{tpu_custom_call.1} parent=0 // pred_fallthru
    _
  // Predicated region
  $region6: #{tpu_custom_call.1} parent=0 // pred_check
    _
  $region7: #{tpu_custom_call.1} parent=0 // pred_check_branch
    %17 = sbr.rel (0) target = $region9
  $region8: #{tpu_custom_call.1} parent=0 // pred_region
    _
  $region9: #{tpu_custom_call.1} parent=0 // pred_fallthru
    _
  // Predicated region
  $region10: #{tpu_custom_call.1} parent=0 // pred_check
    _
  $region11: #{tpu_custom_call.1} parent=0 // pred_check_branch
    %19 = sbr.rel (0) target = $region13
  $region12: #{tpu_custom_call.1} parent=0 // pred_region
    _
  $region13: #{tpu_custom_call.1} parent=0 // pred_fallthru
    _
  // Predicated region
  $region14: #{tpu_custom_call.1} parent=0 // pred_check
    _
  $region15: #{tpu_custom_call.1} parent=0 // pred_check_branch
    %21 = sbr.rel (0) target = $region17
  $region16: #{tpu_custom_call.1} parent=0 // pred_region
    _
  $region17: #{tpu_custom_call.1} parent=0 // pred_fallthru
    _
  // Predicated region
  $region18: #{tpu_custom_call.1} parent=0 // pred_check
    _
  $region19: #{tpu_custom_call.1} parent=0 // pred_check_branch
    %23 = sbr.rel (0) target = $region21
  $region20: #{tpu_custom_call.1} parent=0 // pred_region
    _
  $region21: #{tpu_custom_call.1} parent=0 // pred_fallthru
    _
  // Predicated region
  $region22: #{tpu_custom_call.1} parent=0 // pred_check
    _
  $region23: #{tpu_custom_call.1} parent=0 // pred_check_branch
    %25 = sbr.rel (0) target = $region25
  $region24: #{tpu_custom_call.1} parent=0 // pred_region
    _
  $region25: #{tpu_custom_call.1} parent=0 // pred_fallthru
    _
  // Predicated region
  $region26: #{tpu_custom_call.1} parent=0 // pred_check
    _
  $region27: #{tpu_custom_call.1} parent=0 // pred_check_branch
    %27 = sbr.rel (0) target = $region29
  $region28: #{tpu_custom_call.1} parent=0 // pred_region
    _
  $region29: #{tpu_custom_call.1} parent=0 // pred_fallthru
    _
  %v28 = vld [vmem:[%s0] sm:$0xff]
  %v29 = vld [vmem:[%s1] sm:$0xff]
  %v30 = vld [vmem:[%s1 + $0x8] sm:$0xff]
  %v31 = vld [vmem:[%s1 + $0x10] sm:$0xff]
  %v32 = vld [vmem:[%s1 + $0x18] sm:$0xff]
  %v33 = vld [vmem:[%s2] sm:$0x1]
  %v35 = vlaneseq
  %v36 = vshrl.u32 %v35, 7
  %v37 = vsub.s32 0, %v36
  %v38 = vrot.slane %v33, %v37
  %vm40 = vcmask 261120
  %v42 = vsel %vm40, %v28, 0
  %44 = vmatprep.subr.mxu0 0.0
  %45 = vmatpush1.msra.mxu0 %v29
  %46 = vmatprep.subr.mxu0 0.0
  %47 = vmatpush1.msra.mxu0 %v30
  %48 = vmatprep.subr.mxu0 0.0
  %49 = vmatpush1.msra.mxu0 %v31
  %50 = vmatprep.subr.mxu0 0.0
  %51 = vmatpush1.msra.mxu0 %v32
  %52 = vmatprep.subr.mxu0 0.0
  %53 = vmatpush1.msra.mxu0 0.0
  %54 = vmatprep.subr.mxu0 0.0
  %55 = vmatpush1.msra.mxu0 0.0
  %56 = vmatprep.subr.mxu0 0.0
  %57 = vmatpush1.msra.mxu0 0.0
  %58 = vmatprep.subr.mxu0 0.0
  %59 = vmatpush1.msra.mxu0 0.0
  %60 = vmatprep.subr.mxu0 0.0
  %61 = vmatpush1.msra.mxu0 0.0
  %62 = vmatprep.subr.mxu0 0.0
  %63 = vmatpush1.msra.mxu0 0.0
  %64 = vmatprep.subr.mxu0 0.0
  %65 = vmatpush1.msra.mxu0 0.0
  %66 = vmatprep.subr.mxu0 0.0
  %67 = vmatpush1.msra.mxu0 0.0
  %68 = vmatprep.subr.mxu0 0.0
  %69 = vmatpush1.msra.mxu0 0.0
  %70 = vmatprep.subr.mxu0 0.0
  %71 = vmatpush1.msra.mxu0 0.0
  %72 = vmatprep.subr.mxu0 0.0
  %73 = vmatpush1.msra.mxu0 0.0
  %74 = vmatprep.subr.mxu0 0.0
  %75 = vmatpush1.msra.mxu0 0.0
  %76 = vmatprep.subr.mxu0 0.0
  %77 = vmatpush1.msra.mxu0 0.0
  %78 = vmatprep.subr.mxu0 0.0
  %79 = vmatpush1.msra.mxu0 0.0
  %80 = vmatprep.subr.mxu0 0.0
  %81 = vmatpush1.msra.mxu0 0.0
  %82 = vmatprep.subr.mxu0 0.0
  %83 = vmatpush1.msra.mxu0 0.0
  %84 = vmatprep.subr.mxu0 0.0
  %85 = vmatpush1.msra.mxu0 0.0
  %86 = vmatprep.subr.mxu0 0.0
  %87 = vmatpush1.msra.mxu0 0.0
  %88 = vmatprep.subr.mxu0 0.0
  %89 = vmatpush1.msra.mxu0 0.0
  %90 = vmatprep.subr.mxu0 0.0
  %91 = vmatpush1.msra.mxu0 0.0
  %92 = vmatprep.subr.mxu0 0.0
  %93 = vmatpush1.msra.mxu0 0.0
  %94 = vmatprep.subr.mxu0 0.0
  %95 = vmatpush1.msra.mxu0 0.0
  %96 = vmatprep.subr.mxu0 0.0
  %97 = vmatpush1.msra.mxu0 0.0
  %98 = vmatprep.subr.mxu0 0.0
  %99 = vmatpush1.msra.mxu0 0.0
  %100 = vmatprep.subr.mxu0 0.0
  %101 = vmatpush1.msra.mxu0 0.0
  %102 = vmatprep.subr.mxu0 0.0
  %103 = vmatpush1.msra.mxu0 0.0
  %104 = vmatprep.subr.mxu0 0.0
  %105 = vmatpush1.msra.mxu0 0.0
  %106 = vmatprep.subr.mxu0 0.0
  %107 = vmatpush1.msra.mxu0 0.0
  %108 = vmatprep.mubr.f32.mxu0 0.0
  %109 = vmatmul.mubr.f32.gmra.mrb[0].mxu0 %v42
  %v110 = vpop.f32.mrb[0].mxu0
  %v111 = vadd.f32 %v38, %v110
  %v112 = vpop.f32.mrb[0].mxu0
  %113 = vdwg.mxu0
  %v114 = vmax.f32 %v111, 0.0
  %v115 = vld [vmem:[%s3] sm:$0xff]
  %v116 = vld [vmem:[%s3 + $0x8] sm:$0xff]
  %v117 = vld [vmem:[%s3 + $0x10] sm:$0xff]
  %v118 = vld [vmem:[%s3 + $0x18] sm:$0xff]
  %v119 = vld [vmem:[%s3 + $0x20] sm:$0xff]
  %v120 = vld [vmem:[%s3 + $0x28] sm:$0xff]
  %v121 = vld [vmem:[%s3 + $0x30] sm:$0xff]
  %v122 = vld [vmem:[%s3 + $0x38] sm:$0xff]
  %v123 = vld [vmem:[%s4] sm:$0x1]
  %v125 = vlaneseq
  %v126 = vshrl.u32 %v125, 7
  %v127 = vsub.s32 0, %v126
  %v128 = vrot.slane %v123, %v127
  %vm130 = vcmask 523264
  %v132 = vsel %vm130, %v114, 0
  %134 = vmatprep.subr.mxu0 0.0
  %135 = vmatpush1.msra.mxu0 %v115
  %136 = vmatprep.subr.mxu0 0.0
  %137 = vmatpush1.msra.mxu0 %v116
  %138 = vmatprep.subr.mxu0 0.0
  %139 = vmatpush1.msra.mxu0 %v117
  %140 = vmatprep.subr.mxu0 0.0
  %141 = vmatpush1.msra.mxu0 %v118
  %142 = vmatprep.subr.mxu0 0.0
  %143 = vmatpush1.msra.mxu0 %v119
  %144 = vmatprep.subr.mxu0 0.0
  %145 = vmatpush1.msra.mxu0 %v120
  %146 = vmatprep.subr.mxu0 0.0
  %147 = vmatpush1.msra.mxu0 %v121
  %148 = vmatprep.subr.mxu0 0.0
  %149 = vmatpush1.msra.mxu0 %v122
  %150 = vmatprep.subr.mxu0 0.0
  %151 = vmatpush1.msra.mxu0 0.0
  %152 = vmatprep.subr.mxu0 0.0
  %153 = vmatpush1.msra.mxu0 0.0
  %154 = vmatprep.subr.mxu0 0.0
  %155 = vmatpush1.msra.mxu0 0.0
  %156 = vmatprep.subr.mxu0 0.0
  %157 = vmatpush1.msra.mxu0 0.0
  %158 = vmatprep.subr.mxu0 0.0
  %159 = vmatpush1.msra.mxu0 0.0
  %160 = vmatprep.subr.mxu0 0.0
  %161 = vmatpush1.msra.mxu0 0.0
  %162 = vmatprep.subr.mxu0 0.0
  %163 = vmatpush1.msra.mxu0 0.0
  %164 = vmatprep.subr.mxu0 0.0
  %165 = vmatpush1.msra.mxu0 0.0
  %166 = vmatprep.subr.mxu0 0.0
  %167 = vmatpush1.msra.mxu0 0.0
  %168 = vmatprep.subr.mxu0 0.0
  %169 = vmatpush1.msra.mxu0 0.0
  %170 = vmatprep.subr.mxu0 0.0
  %171 = vmatpush1.msra.mxu0 0.0
  %172 = vmatprep.subr.mxu0 0.0
  %173 = vmatpush1.msra.mxu0 0.0
  %174 = vmatprep.subr.mxu0 0.0
  %175 = vmatpush1.msra.mxu0 0.0
  %176 = vmatprep.subr.mxu0 0.0
  %177 = vmatpush1.msra.mxu0 0.0
  %178 = vmatprep.subr.mxu0 0.0
  %179 = vmatpush1.msra.mxu0 0.0
  %180 = vmatprep.subr.mxu0 0.0
  %181 = vmatpush1.msra.mxu0 0.0
  %182 = vmatprep.subr.mxu0 0.0
  %183 = vmatpush1.msra.mxu0 0.0
  %184 = vmatprep.subr.mxu0 0.0
  %185 = vmatpush1.msra.mxu0 0.0
  %186 = vmatprep.subr.mxu0 0.0
  %187 = vmatpush1.msra.mxu0 0.0
  %188 = vmatprep.subr.mxu0 0.0
  %189 = vmatpush1.msra.mxu0 0.0
  %190 = vmatprep.subr.mxu0 0.0
  %191 = vmatpush1.msra.mxu0 0.0
  %192 = vmatprep.subr.mxu0 0.0
  %193 = vmatpush1.msra.mxu0 0.0
  %194 = vmatprep.subr.mxu0 0.0
  %195 = vmatpush1.msra.mxu0 0.0
  %196 = vmatprep.subr.mxu0 0.0
  %197 = vmatpush1.msra.mxu0 0.0
  %198 = vmatprep.mubr.f32.mxu0 0.0
  %199 = vmatmul.mubr.f32.gmra.mrb[0].mxu0 %v132
  %v200 = vpop.f32.mrb[0].mxu0
  %v201 = vadd.f32 %v128, %v200
  %v202 = vpop.f32.mrb[0].mxu0
  %203 = vdwg.mxu0
  %v204 = vmax.f32 %v201, 0.0
  %v205 = vld [vmem:[%s5] sm:$0xff]
  %v206 = vld [vmem:[%s5 + $0x8] sm:$0xff]
  %v207 = vld [vmem:[%s5 + $0x10] sm:$0xff]
  %v208 = vld [vmem:[%s5 + $0x18] sm:$0xff]
  %v209 = vld [vmem:[#allocation2] sm:$0x1]
  %v211 = vlaneseq
  %v212 = vshrl.u32 %v211, 7
  %v213 = vsub.s32 0, %v212
  %v214 = vrot.slane %v209, %v213
  %v217 = vsel %vm40, %v204, 0
  %219 = vmatprep.subr.mxu0 0.0
  %220 = vmatpush1.msra.mxu0 %v205
  %221 = vmatprep.subr.mxu0 0.0
  %222 = vmatpush1.msra.mxu0 %v206
  %223 = vmatprep.subr.mxu0 0.0
  %224 = vmatpush1.msra.mxu0 %v207
  %225 = vmatprep.subr.mxu0 0.0
  %226 = vmatpush1.msra.mxu0 %v208
  %227 = vmatprep.subr.mxu0 0.0
  %228 = vmatpush1.msra.mxu0 0.0
  %229 = vmatprep.subr.mxu0 0.0
  %230 = vmatpush1.msra.mxu0 0.0
  %231 = vmatprep.subr.mxu0 0.0
  %232 = vmatpush1.msra.mxu0 0.0
  %233 = vmatprep.subr.mxu0 0.0
  %234 = vmatpush1.msra.mxu0 0.0
  %235 = vmatprep.subr.mxu0 0.0
  %236 = vmatpush1.msra.mxu0 0.0
  %237 = vmatprep.subr.mxu0 0.0
  %238 = vmatpush1.msra.mxu0 0.0
  %239 = vmatprep.subr.mxu0 0.0
  %240 = vmatpush1.msra.mxu0 0.0
  %241 = vmatprep.subr.mxu0 0.0
  %242 = vmatpush1.msra.mxu0 0.0
  %243 = vmatprep.subr.mxu0 0.0
  %244 = vmatpush1.msra.mxu0 0.0
  %245 = vmatprep.subr.mxu0 0.0
  %246 = vmatpush1.msra.mxu0 0.0
  %247 = vmatprep.subr.mxu0 0.0
  %248 = vmatpush1.msra.mxu0 0.0
  %249 = vmatprep.subr.mxu0 0.0
  %250 = vmatpush1.msra.mxu0 0.0
  %251 = vmatprep.subr.mxu0 0.0
  %252 = vmatpush1.msra.mxu0 0.0
  %253 = vmatprep.subr.mxu0 0.0
  %254 = vmatpush1.msra.mxu0 0.0
  %255 = vmatprep.subr.mxu0 0.0
  %256 = vmatpush1.msra.mxu0 0.0
  %257 = vmatprep.subr.mxu0 0.0
  %258 = vmatpush1.msra.mxu0 0.0
  %259 = vmatprep.subr.mxu0 0.0
  %260 = vmatpush1.msra.mxu0 0.0
  %261 = vmatprep.subr.mxu0 0.0
  %262 = vmatpush1.msra.mxu0 0.0
  %263 = vmatprep.subr.mxu0 0.0
  %264 = vmatpush1.msra.mxu0 0.0
  %265 = vmatprep.subr.mxu0 0.0
  %266 = vmatpush1.msra.mxu0 0.0
  %267 = vmatprep.subr.mxu0 0.0
  %268 = vmatpush1.msra.mxu0 0.0
  %269 = vmatprep.subr.mxu0 0.0
  %270 = vmatpush1.msra.mxu0 0.0
  %271 = vmatprep.subr.mxu0 0.0
  %272 = vmatpush1.msra.mxu0 0.0
  %273 = vmatprep.subr.mxu0 0.0
  %274 = vmatpush1.msra.mxu0 0.0
  %275 = vmatprep.subr.mxu0 0.0
  %276 = vmatpush1.msra.mxu0 0.0
  %277 = vmatprep.subr.mxu0 0.0
  %278 = vmatpush1.msra.mxu0 0.0
  %279 = vmatprep.subr.mxu0 0.0
  %280 = vmatpush1.msra.mxu0 0.0
  %281 = vmatprep.subr.mxu0 0.0
  %282 = vmatpush1.msra.mxu0 0.0
  %283 = vmatprep.mubr.f32.mxu0 0.0
  %284 = vmatmul.mubr.f32.gmra.mrb[0].mxu0 %v217
  %v285 = vpop.f32.mrb[0].mxu0
  %v286 = vadd.f32 %v214, %v285
  %v287 = vpop.f32.mrb[0].mxu0
  %288 = vdwg.mxu0
  %vm289 = vcmask 7168
  %290 = vst.msk [vmem:[%s7] sm:$0xff] %vm289, %v286
  // Predicated region
  $region30: #{tpu_custom_call.1} parent=0 // pred_check
    _
  $region31: #{tpu_custom_call.1} parent=0 // pred_check_branch
    %292 = sbr.rel (0) target = $region33
  $region32: #{tpu_custom_call.1} parent=0 // pred_region
    _
  $region33: #{tpu_custom_call.1} parent=0 // pred_fallthru
    _
  // Predicated region
  $region34: #{tpu_custom_call.1} parent=0 // pred_check
    _
  $region35: #{tpu_custom_call.1} parent=0 // pred_check_branch
    %294 = sbr.rel (0) target = $region37
  $region36: #{tpu_custom_call.1} parent=0 // pred_region
    _
  $region37: #{tpu_custom_call.1} parent=0 // pred_fallthru
    _

</llo_original>
